<compile_context>
chip_gen: v5e
topology: v5e:2x2
jax: 0.10.0
libtpu: 0.0.40
codegen_flags: <defaults>
</compile_context>

<pallas_src>
import functools

import jax
import jax.numpy as jnp
from jax.experimental import pallas as pl
from jax.experimental.pallas import tpu as pltpu

LANE = 128
SUBLANE = 8


def _round_up(x, m):
    return ((x + m - 1) // m) * m


def _gatnet_kernel(adj_ref, x_ref, *refs, layer_meta):
    """refs = (w0, att_src0, att_dst0, b0, w1, att_src1, ..., out_ref).

    layer_meta: tuple of (heads, c_pad, concat, apply_gelu) per layer (static).
    """
    out_ref = refs[-1]
    param_refs = refs[:-1]

    adj = adj_ref[...]                     # [Np, Np] f32; 1.0 = edge j->i (incl. self-loop)
    mask = adj > 0.0
    neg_big = jnp.float32(-1e30)
    inv_sqrt2 = jnp.float32(0.7071067811865476)

    h = x_ref[...]                         # activations stay in VMEM/vregs end-to-end
    p_idx = 0
    for heads, c_pad, concat, apply_gelu in layer_meta:
        w_ref, asrc_ref, adst_ref, b_ref = param_refs[p_idx:p_idx + 4]
        p_idx += 4

        # One shared projection for all heads: [Np, heads * c_pad]
        proj = jnp.dot(h, w_ref[...], preferred_element_type=jnp.float32)
        asrc = asrc_ref[...]               # [heads, c_pad]
        adst = adst_ref[...]               # [heads, c_pad]

        head_outs = []
        for hh in range(heads):            # static unroll (heads = 3 or 1)
            ph = proj[:, hh * c_pad:(hh + 1) * c_pad]            # [Np, c_pad], lane-aligned
            # a_src as a row [1, Np] and a_dst as a column [Np, 1]; both are
            # rhs-transposed MXU contractions — no lane<->sublane transpose needed.
            a_s_row = jax.lax.dot_general(
                asrc[hh:hh + 1, :], ph,
                dimension_numbers=(((1,), (1,)), ((), ())),
                preferred_element_type=jnp.float32)              # [1, Np]
            a_d_col = jax.lax.dot_general(
                ph, adst[hh:hh + 1, :],
                dimension_numbers=(((1,), (1,)), ((), ())),
                preferred_element_type=jnp.float32)              # [Np, 1]

            e = a_d_col + a_s_row                                # [Np, Np] (2 broadcasts)
            e = jnp.where(e >= 0.0, e, 0.2 * e)                  # LeakyReLU(0.2)
            e = jnp.where(mask, e, neg_big)
            # Numerically-stable masked softmax over incoming edges (rows).
            e = e - jnp.max(e, axis=-1, keepdims=True)
            p = jnp.exp(e)
            p = jnp.where(mask, p, 0.0)
            alpha = p * pl.reciprocal(jnp.sum(p, axis=-1, keepdims=True), approx=False)
            head_outs.append(
                jnp.dot(alpha, ph, preferred_element_type=jnp.float32))  # [Np, c_pad]

        if concat:
            out = head_outs[0] if heads == 1 else jnp.concatenate(head_outs, axis=-1)
        else:
            acc = head_outs[0]
            for t in head_outs[1:]:
                acc = acc + t
            out = acc * jnp.float32(1.0 / heads)

        out = out + b_ref[...]                                   # [1, out_pad] broadcast
        if apply_gelu:                                           # exact erf GELU (nn.GELU default)
            out = 0.5 * out * (1.0 + jax.lax.erf(out * inv_sqrt2))
        h = out

    out_ref[...] = h.astype(out_ref.dtype)


def gatnet_forward(x, edge_index, params):
    """x: [N, F0] f32; edge_index: [2, E] int32 (row0 = src j, row1 = dst i)."""
    n, f0 = x.shape
    n_pad = _round_up(max(n, SUBLANE), SUBLANE)

    # Dense adjacency mask with self-loops (PyG GATConv default add_self_loops=True).
    # Assumes no duplicate edges in edge_index (duplicates collapse in the dense mask).
    src, dst = edge_index[0], edge_index[1]
    adj = jnp.zeros((n_pad, n_pad), jnp.float32)
    adj = adj.at[dst, src].set(1.0)
    adj = adj.at[jnp.arange(n_pad), jnp.arange(n_pad)].set(1.0)

    # Lane-dense node features.
    f0_pad = _round_up(f0, LANE)
    x_pad = jnp.zeros((n_pad, f0_pad), jnp.float32).at[:n, :f0].set(x)

    inputs = [adj, x_pad]
    in_specs = [
        pl.BlockSpec((n_pad, n_pad), lambda i: (0, 0)),
        pl.BlockSpec((n_pad, f0_pad), lambda i: (0, 0)),
    ]

    layer_meta = []
    num_layers = len(params)
    in_w, in_w_pad = f0, f0_pad
    for li, prm in enumerate(params):
        w, att_src, att_dst, b = prm["w"], prm["att_src"], prm["att_dst"], prm["b"]
        heads, concat = prm["heads"], prm["concat"]
        c = att_src.shape[1]
        c_pad = _round_up(c, LANE)
        out_w_pad = heads * c_pad if concat else c_pad

        # Weight [in_w, heads*c] -> zero-padded [in_w_pad, heads*c_pad], per-head blocks.
        w_pad = jnp.zeros((in_w_pad, heads * c_pad), jnp.float32)
        for hh in range(heads):
            w_pad = w_pad.at[:in_w, hh * c_pad:hh * c_pad + c].set(w[:, hh * c:(hh + 1) * c])
        asrc_pad = jnp.zeros((heads, c_pad), jnp.float32).at[:, :c].set(att_src)
        adst_pad = jnp.zeros((heads, c_pad), jnp.float32).at[:, :c].set(att_dst)
        b_pad = jnp.zeros((1, out_w_pad), jnp.float32)
        if concat:
            for hh in range(heads):
                b_pad = b_pad.at[0, hh * c_pad:hh * c_pad + c].set(b[hh * c:(hh + 1) * c])
        else:
            b_pad = b_pad.at[0, :c].set(b)

        inputs += [w_pad, asrc_pad, adst_pad, b_pad]
        in_specs += [
            pl.BlockSpec(w_pad.shape, lambda i: (0, 0)),
            pl.BlockSpec(asrc_pad.shape, lambda i: (0, 0)),
            pl.BlockSpec(adst_pad.shape, lambda i: (0, 0)),
            pl.BlockSpec(b_pad.shape, lambda i: (0, 0)),
        ]
        layer_meta.append((heads, c_pad, concat, li < num_layers - 1))
        in_w = heads * c if concat else c
        in_w_pad = out_w_pad

    out_w, out_w_pad = in_w, in_w_pad
    kernel = functools.partial(_gatnet_kernel, layer_meta=tuple(layer_meta))

    out_pad = pl.pallas_call(
        kernel,
        out_shape=jax.ShapeDtypeStruct((n_pad, out_w_pad), jnp.float32),
        grid=(1,),
        in_specs=in_specs,
        out_specs=pl.BlockSpec((n_pad, out_w_pad), lambda i: (0, 0)),
        compiler_params=pltpu.CompilerParams(dimension_semantics=("arbitrary",)),
    )(*inputs)
    return out_pad[:n, :out_w]


def init_gatnet_params(key, planes):
    """Deterministic params with the shapes implied by GATNet:
    hidden layers GATConv(heads=3, concat=False), last layer GATConv(heads=1, concat=True).
    Weights are stored pre-transposed as [F_in, heads*C]."""
    params = []
    num_layers = len(planes) - 1
    for i in range(num_layers):
        f_in, c = planes[i], planes[i + 1]
        heads, concat = (3, False) if i < num_layers - 1 else (1, True)
        key, k1, k2, k3 = jax.random.split(key, 4)
        scale = 1.0 / jnp.sqrt(jnp.float32(f_in))
        w = jax.random.uniform(k1, (f_in, heads * c), jnp.float32, -scale, scale)
        att_src = jax.random.uniform(k2, (heads, c), jnp.float32, -scale, scale)
        att_dst = jax.random.uniform(k3, (heads, c), jnp.float32, -scale, scale)
        b = jnp.zeros((heads * c if concat else c,), jnp.float32)  # PyG init: zeros
        params.append(dict(w=w, att_src=att_src, att_dst=att_dst, b=b,
                           heads=heads, concat=concat))
    return params


if __name__ == "__main__":
    key = jax.random.PRNGKey(0)

    planes = [4, 32, 8]    # GATConv(4->32, heads=3, concat=False) + GELU, GATConv(32->8, heads=1)
    num_nodes = 16

    # Deterministic small graph: bidirectional ring (no duplicate edges).
    ring_src = jnp.arange(num_nodes, dtype=jnp.int32)
    ring_dst = (ring_src + 1) % num_nodes
    edge_index = jnp.concatenate(
        [jnp.stack([ring_src, ring_dst], axis=0),
         jnp.stack([ring_dst, ring_src], axis=0)], axis=1)   # [2, 32]

    kx, kp = jax.random.split(key)
    x = jax.random.normal(kx, (num_nodes, planes[0]), jnp.float32)
    params = init_gatnet_params(kp, planes)

    out = gatnet_forward(x, edge_index, params)
    jax.block_until_ready(out)
    assert out.shape == (num_nodes, planes[-1]), out.shape
    assert bool(jnp.all(jnp.isfinite(out))), "non-finite output"
    print("KERNEL_OK")
</pallas_src>

<mosaic_0001>
module attributes {stable_mosaic.version = 11 : i64} {
  func.func @_gatnet_kernel(%arg0: i32, %arg1: memref<16x16xf32, #tpu.memory_space<vmem>>, %arg2: memref<16x128xf32, #tpu.memory_space<vmem>>, %arg3: memref<128x384xf32, #tpu.memory_space<vmem>>, %arg4: memref<3x128xf32, #tpu.memory_space<vmem>>, %arg5: memref<3x128xf32, #tpu.memory_space<vmem>>, %arg6: memref<1x128xf32, #tpu.memory_space<vmem>>, %arg7: memref<128x128xf32, #tpu.memory_space<vmem>>, %arg8: memref<1x128xf32, #tpu.memory_space<vmem>>, %arg9: memref<1x128xf32, #tpu.memory_space<vmem>>, %arg10: memref<1x128xf32, #tpu.memory_space<vmem>>, %arg11: memref<16x128xf32, #tpu.memory_space<vmem>>) attributes {dimension_semantics = [#tpu.dimension_semantics<arbitrary>], iteration_bounds = array<i64: 1>, scalar_prefetch = 0 : i64, scratch_operands = 0 : i64, tpu.core_type = #tpu.core_type<tc>, window_params = [{pipeline_mode = #tpu.pipeline_mode<synchronous>, transform_indices = @transform_0, window_bounds = array<i64: 16, 16>}, {pipeline_mode = #tpu.pipeline_mode<synchronous>, transform_indices = @transform_1, window_bounds = array<i64: 16, 128>}, {pipeline_mode = #tpu.pipeline_mode<synchronous>, transform_indices = @transform_2, window_bounds = array<i64: 128, 384>}, {pipeline_mode = #tpu.pipeline_mode<synchronous>, transform_indices = @transform_3, window_bounds = array<i64: 3, 128>}, {pipeline_mode = #tpu.pipeline_mode<synchronous>, transform_indices = @transform_4, window_bounds = array<i64: 3, 128>}, {pipeline_mode = #tpu.pipeline_mode<synchronous>, transform_indices = @transform_5, window_bounds = array<i64: 1, 128>}, {pipeline_mode = #tpu.pipeline_mode<synchronous>, transform_indices = @transform_6, window_bounds = array<i64: 128, 128>}, {pipeline_mode = #tpu.pipeline_mode<synchronous>, transform_indices = @transform_7, window_bounds = array<i64: 1, 128>}, {pipeline_mode = #tpu.pipeline_mode<synchronous>, transform_indices = @transform_8, window_bounds = array<i64: 1, 128>}, {pipeline_mode = #tpu.pipeline_mode<synchronous>, transform_indices = @transform_9, window_bounds = array<i64: 1, 128>}, {pipeline_mode = #tpu.pipeline_mode<synchronous>, transform_indices = @transform_10, window_bounds = array<i64: 16, 128>}]} {
    %c0 = arith.constant 0 : index
    %c0_0 = arith.constant 0 : index
    %0 = vector.load %arg1[%c0, %c0_0] : memref<16x16xf32, #tpu.memory_space<vmem>>, vector<16x16xf32>
    %cst = arith.constant 0.000000e+00 : f32
    %1 = vector.broadcast %cst : f32 to vector<16x16xf32>
    %2 = arith.cmpf ogt, %0, %1 : vector<16x16xf32>
    %c0_1 = arith.constant 0 : index
    %c0_2 = arith.constant 0 : index
    %3 = vector.load %arg2[%c0_1, %c0_2] : memref<16x128xf32, #tpu.memory_space<vmem>>, vector<16x128xf32>
    %c0_3 = arith.constant 0 : index
    %c0_4 = arith.constant 0 : index
    %4 = vector.load %arg3[%c0_3, %c0_4] : memref<128x384xf32, #tpu.memory_space<vmem>>, vector<128x384xf32>
    %cst_5 = arith.constant dense<0.000000e+00> : vector<16x384xf32>
    %5 = tpu.matmul %3, %4, %cst_5 {dimension_numbers = #tpu.dot_dimension_numbers<[1], [0], [0], [1], [0, 0, 1, 1], [], []>} : vector<16x128xf32>, vector<128x384xf32>, vector<16x384xf32> -> vector<16x384xf32>
    %c0_6 = arith.constant 0 : index
    %c0_7 = arith.constant 0 : index
    %6 = vector.load %arg4[%c0_6, %c0_7] : memref<3x128xf32, #tpu.memory_space<vmem>>, vector<3x128xf32>
    %c0_8 = arith.constant 0 : index
    %c0_9 = arith.constant 0 : index
    %7 = vector.load %arg5[%c0_8, %c0_9] : memref<3x128xf32, #tpu.memory_space<vmem>>, vector<3x128xf32>
    %8 = vector.extract_strided_slice %5 {offsets = [0, 0], sizes = [16, 128], strides = [1, 1]} : vector<16x384xf32> to vector<16x128xf32>
    %9 = vector.extract_strided_slice %6 {offsets = [0, 0], sizes = [1, 128], strides = [1, 1]} : vector<3x128xf32> to vector<1x128xf32>
    %cst_10 = arith.constant dense<0.000000e+00> : vector<1x16xf32>
    %10 = tpu.matmul %9, %8, %cst_10 {dimension_numbers = #tpu.dot_dimension_numbers<[1], [1], [0], [0], [0, 0, 1, 0], [], []>} : vector<1x128xf32>, vector<16x128xf32>, vector<1x16xf32> -> vector<1x16xf32>
    %11 = vector.extract_strided_slice %7 {offsets = [0, 0], sizes = [1, 128], strides = [1, 1]} : vector<3x128xf32> to vector<1x128xf32>
    %cst_11 = arith.constant dense<0.000000e+00> : vector<16x1xf32>
    %12 = tpu.matmul %8, %11, %cst_11 {dimension_numbers = #tpu.dot_dimension_numbers<[1], [1], [0], [0], [0, 0, 1, 0], [], []>} : vector<16x128xf32>, vector<1x128xf32>, vector<16x1xf32> -> vector<16x1xf32>
    %13 = vector.broadcast %12 : vector<16x1xf32> to vector<16x16xf32>
    %14 = vector.broadcast %10 : vector<1x16xf32> to vector<16x16xf32>
    %15 = arith.addf %13, %14 : vector<16x16xf32>
    %cst_12 = arith.constant 0.000000e+00 : f32
    %16 = vector.broadcast %cst_12 : f32 to vector<16x16xf32>
    %17 = arith.cmpf oge, %15, %16 : vector<16x16xf32>
    %cst_13 = arith.constant 2.000000e-01 : f32
    %18 = vector.broadcast %cst_13 : f32 to vector<16x16xf32>
    %19 = arith.mulf %18, %15 : vector<16x16xf32>
    %20 = arith.select %17, %15, %19 : vector<16x16xi1>, vector<16x16xf32>
    %cst_14 = arith.constant -1.000000e+30 : f32
    %21 = vector.broadcast %cst_14 : f32 to vector<16x16xf32>
    %22 = arith.select %2, %20, %21 : vector<16x16xi1>, vector<16x16xf32>
    %cst_15 = arith.constant dense<0xFF800000> : vector<16xf32>
    %23 = vector.multi_reduction <maximumf>, %22, %cst_15 [1] : vector<16x16xf32> to vector<16xf32>
    %24 = vector.shape_cast %23 : vector<16xf32> to vector<16x1xf32>
    %25 = vector.broadcast %24 : vector<16x1xf32> to vector<16x16xf32>
    %26 = arith.subf %22, %25 : vector<16x16xf32>
    %27 = math.exp %26 : vector<16x16xf32>
    %cst_16 = arith.constant 0.000000e+00 : f32
    %28 = vector.broadcast %cst_16 : f32 to vector<16x16xf32>
    %29 = arith.select %2, %27, %28 : vector<16x16xi1>, vector<16x16xf32>
    %cst_17 = arith.constant dense<0.000000e+00> : vector<16xf32>
    %30 = vector.multi_reduction <add>, %29, %cst_17 [1] : vector<16x16xf32> to vector<16xf32>
    %31 = vector.shape_cast %30 : vector<16xf32> to vector<16x1xf32>
    %32 = tpu.reciprocal %31 : vector<16x1xf32> -> vector<16x1xf32>
    %33 = vector.broadcast %32 : vector<16x1xf32> to vector<16x16xf32>
    %34 = arith.mulf %29, %33 : vector<16x16xf32>
    %cst_18 = arith.constant dense<0.000000e+00> : vector<16x128xf32>
    %35 = tpu.matmul %34, %8, %cst_18 {dimension_numbers = #tpu.dot_dimension_numbers<[1], [0], [0], [1], [0, 0, 1, 1], [], []>} : vector<16x16xf32>, vector<16x128xf32>, vector<16x128xf32> -> vector<16x128xf32>
    %36 = vector.extract_strided_slice %5 {offsets = [0, 128], sizes = [16, 128], strides = [1, 1]} : vector<16x384xf32> to vector<16x128xf32>
    %37 = vector.extract_strided_slice %6 {offsets = [1, 0], sizes = [1, 128], strides = [1, 1]} : vector<3x128xf32> to vector<1x128xf32>
    %cst_19 = arith.constant dense<0.000000e+00> : vector<1x16xf32>
    %38 = tpu.matmul %37, %36, %cst_19 {dimension_numbers = #tpu.dot_dimension_numbers<[1], [1], [0], [0], [0, 0, 1, 0], [], []>} : vector<1x128xf32>, vector<16x128xf32>, vector<1x16xf32> -> vector<1x16xf32>
    %39 = vector.extract_strided_slice %7 {offsets = [1, 0], sizes = [1, 128], strides = [1, 1]} : vector<3x128xf32> to vector<1x128xf32>
    %cst_20 = arith.constant dense<0.000000e+00> : vector<16x1xf32>
    %40 = tpu.matmul %36, %39, %cst_20 {dimension_numbers = #tpu.dot_dimension_numbers<[1], [1], [0], [0], [0, 0, 1, 0], [], []>} : vector<16x128xf32>, vector<1x128xf32>, vector<16x1xf32> -> vector<16x1xf32>
    %41 = vector.broadcast %40 : vector<16x1xf32> to vector<16x16xf32>
    %42 = vector.broadcast %38 : vector<1x16xf32> to vector<16x16xf32>
    %43 = arith.addf %41, %42 : vector<16x16xf32>
    %cst_21 = arith.constant 0.000000e+00 : f32
    %44 = vector.broadcast %cst_21 : f32 to vector<16x16xf32>
    %45 = arith.cmpf oge, %43, %44 : vector<16x16xf32>
    %cst_22 = arith.constant 2.000000e-01 : f32
    %46 = vector.broadcast %cst_22 : f32 to vector<16x16xf32>
    %47 = arith.mulf %46, %43 : vector<16x16xf32>
    %48 = arith.select %45, %43, %47 : vector<16x16xi1>, vector<16x16xf32>
    %cst_23 = arith.constant -1.000000e+30 : f32
    %49 = vector.broadcast %cst_23 : f32 to vector<16x16xf32>
    %50 = arith.select %2, %48, %49 : vector<16x16xi1>, vector<16x16xf32>
    %cst_24 = arith.constant dense<0xFF800000> : vector<16xf32>
    %51 = vector.multi_reduction <maximumf>, %50, %cst_24 [1] : vector<16x16xf32> to vector<16xf32>
    %52 = vector.shape_cast %51 : vector<16xf32> to vector<16x1xf32>
    %53 = vector.broadcast %52 : vector<16x1xf32> to vector<16x16xf32>
    %54 = arith.subf %50, %53 : vector<16x16xf32>
    %55 = math.exp %54 : vector<16x16xf32>
    %cst_25 = arith.constant 0.000000e+00 : f32
    %56 = vector.broadcast %cst_25 : f32 to vector<16x16xf32>
    %57 = arith.select %2, %55, %56 : vector<16x16xi1>, vector<16x16xf32>
    %cst_26 = arith.constant dense<0.000000e+00> : vector<16xf32>
    %58 = vector.multi_reduction <add>, %57, %cst_26 [1] : vector<16x16xf32> to vector<16xf32>
    %59 = vector.shape_cast %58 : vector<16xf32> to vector<16x1xf32>
    %60 = tpu.reciprocal %59 : vector<16x1xf32> -> vector<16x1xf32>
    %61 = vector.broadcast %60 : vector<16x1xf32> to vector<16x16xf32>
    %62 = arith.mulf %57, %61 : vector<16x16xf32>
    %cst_27 = arith.constant dense<0.000000e+00> : vector<16x128xf32>
    %63 = tpu.matmul %62, %36, %cst_27 {dimension_numbers = #tpu.dot_dimension_numbers<[1], [0], [0], [1], [0, 0, 1, 1], [], []>} : vector<16x16xf32>, vector<16x128xf32>, vector<16x128xf32> -> vector<16x128xf32>
    %64 = vector.extract_strided_slice %5 {offsets = [0, 256], sizes = [16, 128], strides = [1, 1]} : vector<16x384xf32> to vector<16x128xf32>
    %65 = vector.extract_strided_slice %6 {offsets = [2, 0], sizes = [1, 128], strides = [1, 1]} : vector<3x128xf32> to vector<1x128xf32>
    %cst_28 = arith.constant dense<0.000000e+00> : vector<1x16xf32>
    %66 = tpu.matmul %65, %64, %cst_28 {dimension_numbers = #tpu.dot_dimension_numbers<[1], [1], [0], [0], [0, 0, 1, 0], [], []>} : vector<1x128xf32>, vector<16x128xf32>, vector<1x16xf32> -> vector<1x16xf32>
    %67 = vector.extract_strided_slice %7 {offsets = [2, 0], sizes = [1, 128], strides = [1, 1]} : vector<3x128xf32> to vector<1x128xf32>
    %cst_29 = arith.constant dense<0.000000e+00> : vector<16x1xf32>
    %68 = tpu.matmul %64, %67, %cst_29 {dimension_numbers = #tpu.dot_dimension_numbers<[1], [1], [0], [0], [0, 0, 1, 0], [], []>} : vector<16x128xf32>, vector<1x128xf32>, vector<16x1xf32> -> vector<16x1xf32>
    %69 = vector.broadcast %68 : vector<16x1xf32> to vector<16x16xf32>
    %70 = vector.broadcast %66 : vector<1x16xf32> to vector<16x16xf32>
    %71 = arith.addf %69, %70 : vector<16x16xf32>
    %cst_30 = arith.constant 0.000000e+00 : f32
    %72 = vector.broadcast %cst_30 : f32 to vector<16x16xf32>
    %73 = arith.cmpf oge, %71, %72 : vector<16x16xf32>
    %cst_31 = arith.constant 2.000000e-01 : f32
    %74 = vector.broadcast %cst_31 : f32 to vector<16x16xf32>
    %75 = arith.mulf %74, %71 : vector<16x16xf32>
    %76 = arith.select %73, %71, %75 : vector<16x16xi1>, vector<16x16xf32>
    %cst_32 = arith.constant -1.000000e+30 : f32
    %77 = vector.broadcast %cst_32 : f32 to vector<16x16xf32>
    %78 = arith.select %2, %76, %77 : vector<16x16xi1>, vector<16x16xf32>
    %cst_33 = arith.constant dense<0xFF800000> : vector<16xf32>
    %79 = vector.multi_reduction <maximumf>, %78, %cst_33 [1] : vector<16x16xf32> to vector<16xf32>
    %80 = vector.shape_cast %79 : vector<16xf32> to vector<16x1xf32>
    %81 = vector.broadcast %80 : vector<16x1xf32> to vector<16x16xf32>
    %82 = arith.subf %78, %81 : vector<16x16xf32>
    %83 = math.exp %82 : vector<16x16xf32>
    %cst_34 = arith.constant 0.000000e+00 : f32
    %84 = vector.broadcast %cst_34 : f32 to vector<16x16xf32>
    %85 = arith.select %2, %83, %84 : vector<16x16xi1>, vector<16x16xf32>
    %cst_35 = arith.constant dense<0.000000e+00> : vector<16xf32>
    %86 = vector.multi_reduction <add>, %85, %cst_35 [1] : vector<16x16xf32> to vector<16xf32>
    %87 = vector.shape_cast %86 : vector<16xf32> to vector<16x1xf32>
    %88 = tpu.reciprocal %87 : vector<16x1xf32> -> vector<16x1xf32>
    %89 = vector.broadcast %88 : vector<16x1xf32> to vector<16x16xf32>
    %90 = arith.mulf %85, %89 : vector<16x16xf32>
    %cst_36 = arith.constant dense<0.000000e+00> : vector<16x128xf32>
    %91 = tpu.matmul %90, %64, %cst_36 {dimension_numbers = #tpu.dot_dimension_numbers<[1], [0], [0], [1], [0, 0, 1, 1], [], []>} : vector<16x16xf32>, vector<16x128xf32>, vector<16x128xf32> -> vector<16x128xf32>
    %92 = arith.addf %35, %63 : vector<16x128xf32>
    %93 = arith.addf %92, %91 : vector<16x128xf32>
    %cst_37 = arith.constant 0.333333343 : f32
    %94 = vector.broadcast %cst_37 : f32 to vector<16x128xf32>
    %95 = arith.mulf %93, %94 : vector<16x128xf32>
    %c0_38 = arith.constant 0 : index
    %c0_39 = arith.constant 0 : index
    %96 = vector.load %arg6[%c0_38, %c0_39] : memref<1x128xf32, #tpu.memory_space<vmem>>, vector<1x128xf32>
    %97 = vector.broadcast %96 : vector<1x128xf32> to vector<16x128xf32>
    %98 = arith.addf %95, %97 : vector<16x128xf32>
    %cst_40 = arith.constant 5.000000e-01 : f32
    %99 = vector.broadcast %cst_40 : f32 to vector<16x128xf32>
    %100 = arith.mulf %99, %98 : vector<16x128xf32>
    %cst_41 = arith.constant 0.707106769 : f32
    %101 = vector.broadcast %cst_41 : f32 to vector<16x128xf32>
    %102 = arith.mulf %98, %101 : vector<16x128xf32>
    %103 = math.erf %102 : vector<16x128xf32>
    %cst_42 = arith.constant 1.000000e+00 : f32
    %104 = vector.broadcast %cst_42 : f32 to vector<16x128xf32>
    %105 = arith.addf %104, %103 : vector<16x128xf32>
    %106 = arith.mulf %100, %105 : vector<16x128xf32>
    %c0_43 = arith.constant 0 : index
    %c0_44 = arith.constant 0 : index
    %107 = vector.load %arg7[%c0_43, %c0_44] : memref<128x128xf32, #tpu.memory_space<vmem>>, vector<128x128xf32>
    %cst_45 = arith.constant dense<0.000000e+00> : vector<16x128xf32>
    %108 = tpu.matmul %106, %107, %cst_45 {dimension_numbers = #tpu.dot_dimension_numbers<[1], [0], [0], [1], [0, 0, 1, 1], [], []>} : vector<16x128xf32>, vector<128x128xf32>, vector<16x128xf32> -> vector<16x128xf32>
    %c0_46 = arith.constant 0 : index
    %c0_47 = arith.constant 0 : index
    %109 = vector.load %arg8[%c0_46, %c0_47] : memref<1x128xf32, #tpu.memory_space<vmem>>, vector<1x128xf32>
    %c0_48 = arith.constant 0 : index
    %c0_49 = arith.constant 0 : index
    %110 = vector.load %arg9[%c0_48, %c0_49] : memref<1x128xf32, #tpu.memory_space<vmem>>, vector<1x128xf32>
    %cst_50 = arith.constant dense<0.000000e+00> : vector<1x16xf32>
    %111 = tpu.matmul %109, %108, %cst_50 {dimension_numbers = #tpu.dot_dimension_numbers<[1], [1], [0], [0], [0, 0, 1, 0], [], []>} : vector<1x128xf32>, vector<16x128xf32>, vector<1x16xf32> -> vector<1x16xf32>
    %cst_51 = arith.constant dense<0.000000e+00> : vector<16x1xf32>
    %112 = tpu.matmul %108, %110, %cst_51 {dimension_numbers = #tpu.dot_dimension_numbers<[1], [1], [0], [0], [0, 0, 1, 0], [], []>} : vector<16x128xf32>, vector<1x128xf32>, vector<16x1xf32> -> vector<16x1xf32>
    %113 = vector.broadcast %112 : vector<16x1xf32> to vector<16x16xf32>
    %114 = vector.broadcast %111 : vector<1x16xf32> to vector<16x16xf32>
    %115 = arith.addf %113, %114 : vector<16x16xf32>
    %cst_52 = arith.constant 0.000000e+00 : f32
    %116 = vector.broadcast %cst_52 : f32 to vector<16x16xf32>
    %117 = arith.cmpf oge, %115, %116 : vector<16x16xf32>
    %cst_53 = arith.constant 2.000000e-01 : f32
    %118 = vector.broadcast %cst_53 : f32 to vector<16x16xf32>
    %119 = arith.mulf %118, %115 : vector<16x16xf32>
    %120 = arith.select %117, %115, %119 : vector<16x16xi1>, vector<16x16xf32>
    %cst_54 = arith.constant -1.000000e+30 : f32
    %121 = vector.broadcast %cst_54 : f32 to vector<16x16xf32>
    %122 = arith.select %2, %120, %121 : vector<16x16xi1>, vector<16x16xf32>
    %cst_55 = arith.constant dense<0xFF800000> : vector<16xf32>
    %123 = vector.multi_reduction <maximumf>, %122, %cst_55 [1] : vector<16x16xf32> to vector<16xf32>
    %124 = vector.shape_cast %123 : vector<16xf32> to vector<16x1xf32>
    %125 = vector.broadcast %124 : vector<16x1xf32> to vector<16x16xf32>
    %126 = arith.subf %122, %125 : vector<16x16xf32>
    %127 = math.exp %126 : vector<16x16xf32>
    %cst_56 = arith.constant 0.000000e+00 : f32
    %128 = vector.broadcast %cst_56 : f32 to vector<16x16xf32>
    %129 = arith.select %2, %127, %128 : vector<16x16xi1>, vector<16x16xf32>
    %cst_57 = arith.constant dense<0.000000e+00> : vector<16xf32>
    %130 = vector.multi_reduction <add>, %129, %cst_57 [1] : vector<16x16xf32> to vector<16xf32>
    %131 = vector.shape_cast %130 : vector<16xf32> to vector<16x1xf32>
    %132 = tpu.reciprocal %131 : vector<16x1xf32> -> vector<16x1xf32>
    %133 = vector.broadcast %132 : vector<16x1xf32> to vector<16x16xf32>
    %134 = arith.mulf %129, %133 : vector<16x16xf32>
    %cst_58 = arith.constant dense<0.000000e+00> : vector<16x128xf32>
    %135 = tpu.matmul %134, %108, %cst_58 {dimension_numbers = #tpu.dot_dimension_numbers<[1], [0], [0], [1], [0, 0, 1, 1], [], []>} : vector<16x16xf32>, vector<16x128xf32>, vector<16x128xf32> -> vector<16x128xf32>
    %c0_59 = arith.constant 0 : index
    %c0_60 = arith.constant 0 : index
    %136 = vector.load %arg10[%c0_59, %c0_60] : memref<1x128xf32, #tpu.memory_space<vmem>>, vector<1x128xf32>
    %137 = vector.broadcast %136 : vector<1x128xf32> to vector<16x128xf32>
    %138 = arith.addf %135, %137 : vector<16x128xf32>
    %c0_61 = arith.constant 0 : index
    %c0_62 = arith.constant 0 : index
    %139 = vector.load %arg11[%c0_61, %c0_62] : memref<16x128xf32, #tpu.memory_space<vmem>>, vector<16x128xf32>
    tpu.vector_store %arg11[%c0_61, %c0_62], %138 {strides = array<i32>} : memref<16x128xf32, #tpu.memory_space<vmem>>, vector<16x128xf32>,
    return
  }
  func.func @transform_0(%arg0: i32) -> (i32, i32) {
    %c0_i32 = arith.constant 0 : i32
    %c0_i32_0 = arith.constant 0 : i32
    %c0_i32_1 = arith.constant 0 : i32
    return %c0_i32, %c0_i32_0 : i32, i32
  }
  func.func @transform_1(%arg0: i32) -> (i32, i32) {
    %c0_i32 = arith.constant 0 : i32
    %c0_i32_0 = arith.constant 0 : i32
    %c0_i32_1 = arith.constant 0 : i32
    return %c0_i32, %c0_i32_0 : i32, i32
  }
  func.func @transform_2(%arg0: i32) -> (i32, i32) {
    %c0_i32 = arith.constant 0 : i32
    %c0_i32_0 = arith.constant 0 : i32
    %c0_i32_1 = arith.constant 0 : i32
    return %c0_i32, %c0_i32_0 : i32, i32
  }
  func.func @transform_3(%arg0: i32) -> (i32, i32) {
    %c0_i32 = arith.constant 0 : i32
    %c0_i32_0 = arith.constant 0 : i32
    %c0_i32_1 = arith.constant 0 : i32
    return %c0_i32, %c0_i32_0 : i32, i32
  }
  func.func @transform_4(%arg0: i32) -> (i32, i32) {
    %c0_i32 = arith.constant 0 : i32
    %c0_i32_0 = arith.constant 0 : i32
    %c0_i32_1 = arith.constant 0 : i32
    return %c0_i32, %c0_i32_0 : i32, i32
  }
  func.func @transform_5(%arg0: i32) -> (i32, i32) {
    %c0_i32 = arith.constant 0 : i32
    %c0_i32_0 = arith.constant 0 : i32
    %c0_i32_1 = arith.constant 0 : i32
    return %c0_i32, %c0_i32_0 : i32, i32
  }
  func.func @transform_6(%arg0: i32) -> (i32, i32) {
    %c0_i32 = arith.constant 0 : i32
    %c0_i32_0 = arith.constant 0 : i32
    %c0_i32_1 = arith.constant 0 : i32
    return %c0_i32, %c0_i32_0 : i32, i32
  }
  func.func @transform_7(%arg0: i32) -> (i32, i32) {
    %c0_i32 = arith.constant 0 : i32
    %c0_i32_0 = arith.constant 0 : i32
    %c0_i32_1 = arith.constant 0 : i32
    return %c0_i32, %c0_i32_0 : i32, i32
  }
  func.func @transform_8(%arg0: i32) -> (i32, i32) {
    %c0_i32 = arith.constant 0 : i32
    %c0_i32_0 = arith.constant 0 : i32
    %c0_i32_1 = arith.constant 0 : i32
    return %c0_i32, %c0_i32_0 : i32, i32
  }
  func.func @transform_9(%arg0: i32) -> (i32, i32) {
    %c0_i32 = arith.constant 0 : i32
    %c0_i32_0 = arith.constant 0 : i32
    %c0_i32_1 = arith.constant 0 : i32
    return %c0_i32, %c0_i32_0 : i32, i32
  }
  func.func @transform_10(%arg0: i32) -> (i32, i32) {
    %c0_i32 = arith.constant 0 : i32
    %c0_i32_0 = arith.constant 0 : i32
    %c0_i32_1 = arith.constant 0 : i32
    return %c0_i32, %c0_i32_0 : i32, i32
  }
}

</mosaic_0001>

<llo_original>
// kernel: tpu_custom_call.1
$region0: #{tpu_custom_call.1}
  #allocation0 [shape = 'u32[]', space=smem, size = 0x4, offset = 0x4, fixed_abs, tag = 'smem constant byte address 0x4 - core index']
  #allocation1 [shape = 'u32[72,128]{1,0:T(1,128)}', space=vmem, size = 0x9000, scoped, tag = 'internal scratch']
  %s0 = inlined_call_operand.hbm [shape: f32[16,16], index: 0, kind: input, shape index: {}]
  %s1 = inlined_call_operand.hbm [shape: f32[16,128], index: 1, kind: input, shape index: {}]
  %s2 = inlined_call_operand.hbm [shape: f32[128,384], index: 2, kind: input, shape index: {}]
  %s3 = inlined_call_operand.hbm [shape: f32[3,128], index: 3, kind: input, shape index: {}]
  %s4 = inlined_call_operand.hbm [shape: f32[3,128], index: 4, kind: input, shape index: {}]
  %s5 = inlined_call_operand.vmem [shape: f32[1,128], index: 5, kind: input, shape index: {}]
  %s6 = inlined_call_operand.hbm [shape: f32[128,128], index: 6, kind: input, shape index: {}]
  %s7 = inlined_call_operand.vmem [shape: f32[1,128], index: 7, kind: input, shape index: {}]
  %s8 = inlined_call_operand.vmem [shape: f32[1,128], index: 8, kind: input, shape index: {}]
  %s9 = inlined_call_operand.vmem [shape: f32[1,128], index: 9, kind: input, shape index: {}]
  %s10 = inlined_call_operand.hbm [shape: f32[16,128], index: 10, kind: output, shape index: {}]
  %s11 = sld [smem:[#allocation0]]
  $region74: #{tpu_custom_call.1} parent=0
    _
  %s13 = ssub.s32 1, %s11
  %s14 = scalar_select 0, %s13, %s11
  $region1: #{tpu_custom_call.1} parent=0
    #allocation2 [shape = 'u8[8192]{0}', space=vmem, size = 0x2000, scoped, tag = 'input window, operand 0, single buffered']
    #allocation3 [shape = 's32[1]{0}', space=sflag, size = 0x4, scoped, tag = 'scoped memory for tpu_custom_call.1']
    #allocation4 [shape = 's32[1]{0}', space=sflag, size = 0x4, scoped, tag = 'scoped memory for tpu_custom_call.1']
    #allocation5 [shape = 'u8[8192]{0}', space=vmem, size = 0x2000, scoped, tag = 'input window, operand 1, single buffered']
    #allocation6 [shape = 's32[1]{0}', space=sflag, size = 0x4, scoped, tag = 'scoped memory for tpu_custom_call.1']
    #allocation7 [shape = 'u8[196608]{0}', space=vmem, size = 0x30000, scoped, tag = 'input window, operand 2, single buffered']
    #allocation8 [shape = 'u8[2048]{0}', space=vmem, size = 0x800, scoped, tag = 'input window, operand 3, single buffered']
    #allocation9 [shape = 's32[1]{0}', space=sflag, size = 0x4, scoped, tag = 'scoped memory for tpu_custom_call.1']
    #allocation10 [shape = 'u8[2048]{0}', space=vmem, size = 0x800, scoped, tag = 'input window, operand 4, single buffered']
    #allocation11 [shape = 'u8[65536]{0}', space=vmem, size = 0x10000, scoped, tag = 'input window, operand 6, single buffered']
    #allocation12 [shape = 's32[1]{0}', space=sflag, size = 0x4, scoped, tag = 'scoped memory for tpu_custom_call.1']
    #allocation13 [shape = 'u8[8192]{0}', space=vmem, size = 0x2000, scoped, tag = 'output window, operand 0, single buffered']
    %15 = vsyncpa [#allocation3], 0
    %16 = vsyncpa [#allocation6], 0
    %17 = vsyncpa [#allocation9], 0
    %18 = vsyncpa [#allocation12], 0
    %19 = vsyncpa [#allocation4], 0
    // Predicated region
    $region2: #{tpu_custom_call.1} parent=1 // pred_check
      _
    $region3: #{tpu_custom_call.1} parent=1 // pred_check_branch
      %21 = sbr.rel (0) target = $region5
    $region4: #{tpu_custom_call.1} parent=1 // pred_region
      %23 = vsyncadd [#allocation3], 0
      %s24 = sshll.u32 %s0, 4
      %s25 = int_to_ptr.hbm [resolvable:$true] %s24
      %s26 = sshll.u32 [#allocation2], 4
      %s27 = int_to_ptr.vmem [resolvable:$true] %s26
      %32 = dma.hbm_to_vmem [thread:$0]  %s25, 256, %s27, [#allocation3], 128, 128, 8
    $region5: #{tpu_custom_call.1} parent=1 // pred_fallthru
      _
    // Predicated region
    $region6: #{tpu_custom_call.1} parent=1 // pred_check
      _
    $region7: #{tpu_custom_call.1} parent=1 // pred_check_branch
      %34 = sbr.rel (0) target = $region9
    $region8: #{tpu_custom_call.1} parent=1 // pred_region
      %36 = vsyncadd [#allocation6], 0
      %s37 = sshll.u32 %s1, 4
      %s38 = int_to_ptr.hbm [resolvable:$true] %s37
      %s39 = sshll.u32 [#allocation5], 4
      %s40 = int_to_ptr.vmem [resolvable:$true] %s39
      %45 = dma.hbm_to_vmem [thread:$0]  %s38, 256, %s40, [#allocation6], 128, 128, 8
    $region9: #{tpu_custom_call.1} parent=1 // pred_fallthru
      _
    // Predicated region
    $region10: #{tpu_custom_call.1} parent=1 // pred_check
      _
    $region11: #{tpu_custom_call.1} parent=1 // pred_check_branch
      %47 = sbr.rel (0) target = $region13
    $region12: #{tpu_custom_call.1} parent=1 // pred_region
      %49 = vsyncadd [#allocation6], 0
      %s50 = sshll.u32 %s2, 4
      %s51 = int_to_ptr.hbm [resolvable:$true] %s50
      %s52 = sshll.u32 [#allocation7], 4
      %s53 = int_to_ptr.vmem [resolvable:$true] %s52
      %58 = dma.hbm_to_vmem [thread:$0]  %s51, 6144, %s53, [#allocation6], 384, 384, 24
    $region13: #{tpu_custom_call.1} parent=1 // pred_fallthru
      _
    // Predicated region
    $region14: #{tpu_custom_call.1} parent=1 // pred_check
      _
    $region15: #{tpu_custom_call.1} parent=1 // pred_check_branch
      %60 = sbr.rel (0) target = $region17
    $region16: #{tpu_custom_call.1} parent=1 // pred_region
      %62 = vsyncadd [#allocation9], 0
      %s64 = sshll.u32 %s3, 4
      %s65 = int_to_ptr.hbm [resolvable:$true] %s64
      %s66 = sshll.u32 [#allocation8], 4
      %s67 = int_to_ptr.vmem [resolvable:$true] %s66
      %69 = dma.hbm_to_vmem [thread:$0]  %s65, 64, %s67, [#allocation9]
    $region17: #{tpu_custom_call.1} parent=1 // pred_fallthru
      _
    // Predicated region
    $region18: #{tpu_custom_call.1} parent=1 // pred_check
      _
    $region19: #{tpu_custom_call.1} parent=1 // pred_check_branch
      %71 = sbr.rel (0) target = $region21
    $region20: #{tpu_custom_call.1} parent=1 // pred_region
      %73 = vsyncadd [#allocation9], 0
      %s75 = sshll.u32 %s4, 4
      %s76 = int_to_ptr.hbm [resolvable:$true] %s75
      %s77 = sshll.u32 [#allocation10], 4
      %s78 = int_to_ptr.vmem [resolvable:$true] %s77
      %80 = dma.hbm_to_vmem [thread:$0]  %s76, 64, %s78, [#allocation9]
    $region21: #{tpu_custom_call.1} parent=1 // pred_fallthru
      _
    // Predicated region
    $region22: #{tpu_custom_call.1} parent=1 // pred_check
      _
    $region23: #{tpu_custom_call.1} parent=1 // pred_check_branch
      %82 = sbr.rel (0) target = $region25
    $region24: #{tpu_custom_call.1} parent=1 // pred_region
      _
    $region25: #{tpu_custom_call.1} parent=1 // pred_fallthru
      _
    // Predicated region
    $region26: #{tpu_custom_call.1} parent=1 // pred_check
      _
    $region27: #{tpu_custom_call.1} parent=1 // pred_check_branch
      %84 = sbr.rel (0) target = $region29
    $region28: #{tpu_custom_call.1} parent=1 // pred_region
      %86 = vsyncadd [#allocation12], 0
      %s87 = sshll.u32 %s6, 4
      %s88 = int_to_ptr.hbm [resolvable:$true] %s87
      %s89 = sshll.u32 [#allocation11], 4
      %s90 = int_to_ptr.vmem [resolvable:$true] %s89
      %95 = dma.hbm_to_vmem [thread:$0]  %s88, 2048, %s90, [#allocation12], 128, 128, 8
    $region29: #{tpu_custom_call.1} parent=1 // pred_fallthru
      _
    // Predicated region
    $region30: #{tpu_custom_call.1} parent=1 // pred_check
      _
    $region31: #{tpu_custom_call.1} parent=1 // pred_check_branch
      %97 = sbr.rel (0) target = $region33
    $region32: #{tpu_custom_call.1} parent=1 // pred_region
      _
    $region33: #{tpu_custom_call.1} parent=1 // pred_fallthru
      _
    // Predicated region
    $region34: #{tpu_custom_call.1} parent=1 // pred_check
      _
    $region35: #{tpu_custom_call.1} parent=1 // pred_check_branch
      %99 = sbr.rel (0) target = $region37
    $region36: #{tpu_custom_call.1} parent=1 // pred_region
      _
    $region37: #{tpu_custom_call.1} parent=1 // pred_fallthru
      _
    // Predicated region
    $region38: #{tpu_custom_call.1} parent=1 // pred_check
      _
    $region39: #{tpu_custom_call.1} parent=1 // pred_check_branch
      %101 = sbr.rel (0) target = $region41
    $region40: #{tpu_custom_call.1} parent=1 // pred_region
      _
    $region41: #{tpu_custom_call.1} parent=1 // pred_fallthru
      _
    // Predicated region
    $region42: #{tpu_custom_call.1} parent=1 // pred_check
      _
    $region43: #{tpu_custom_call.1} parent=1 // pred_check_branch
      %103 = sbr.rel (0) target = $region45
    $region44: #{tpu_custom_call.1} parent=1 // pred_region
      %105 = dma.done [#allocation3], 256
    $region45: #{tpu_custom_call.1} parent=1 // pred_fallthru
      _
    // Predicated region
    $region46: #{tpu_custom_call.1} parent=1 // pred_check
      _
    $region47: #{tpu_custom_call.1} parent=1 // pred_check_branch
      %107 = sbr.rel (0) target = $region49
    $region48: #{tpu_custom_call.1} parent=1 // pred_region
      %109 = dma.done [#allocation6], 256
    $region49: #{tpu_custom_call.1} parent=1 // pred_fallthru
      _
    // Predicated region
    $region50: #{tpu_custom_call.1} parent=1 // pred_check
      _
    $region51: #{tpu_custom_call.1} parent=1 // pred_check_branch
      %111 = sbr.rel (0) target = $region53
    $region52: #{tpu_custom_call.1} parent=1 // pred_region
      %113 = dma.done [#allocation6], 6144
    $region53: #{tpu_custom_call.1} parent=1 // pred_fallthru
      _
    // Predicated region
    $region54: #{tpu_custom_call.1} parent=1 // pred_check
      _
    $region55: #{tpu_custom_call.1} parent=1 // pred_check_branch
      %115 = sbr.rel (0) target = $region57
    $region56: #{tpu_custom_call.1} parent=1 // pred_region
      %117 = dma.done [#allocation9], 64
    $region57: #{tpu_custom_call.1} parent=1 // pred_fallthru
      _
    // Predicated region
    $region58: #{tpu_custom_call.1} parent=1 // pred_check
      _
    $region59: #{tpu_custom_call.1} parent=1 // pred_check_branch
      %119 = sbr.rel (0) target = $region61
    $region60: #{tpu_custom_call.1} parent=1 // pred_region
      %121 = dma.done [#allocation9], 64
    $region61: #{tpu_custom_call.1} parent=1 // pred_fallthru
      _
    // Predicated region
    $region62: #{tpu_custom_call.1} parent=1 // pred_check
      _
    $region63: #{tpu_custom_call.1} parent=1 // pred_check_branch
      %123 = sbr.rel (0) target = $region65
    $region64: #{tpu_custom_call.1} parent=1 // pred_region
      %125 = dma.done [#allocation12], 2048
    $region65: #{tpu_custom_call.1} parent=1 // pred_fallthru
      _
    %v126 = vld [vmem:[#allocation2] sm:$0xff]
    %v127 = vld [vmem:[#allocation2 + $0x8] sm:$0xff]
    %vm128 = vcmp.gt.f32.partialorder %v126, 0.0
    %vm129 = vcmp.gt.f32.partialorder %v127, 0.0
    %v130 = vld [vmem:[#allocation5] sm:$0xff]
    %v131 = vld [vmem:[#allocation5 + $0x8] sm:$0xff]
    %v132 = vld [vmem:[#allocation7] sm:$0xff]
    %v133 = vld [vmem:[#allocation7 + $0x8] sm:$0xff]
    %v134 = vld [vmem:[#allocation7 + $0x10] sm:$0xff]
    %v135 = vld [vmem:[#allocation7 + $0x18] sm:$0xff]
    %v136 = vld [vmem:[#allocation7 + $0x20] sm:$0xff]
    %v137 = vld [vmem:[#allocation7 + $0x28] sm:$0xff]
    %v138 = vld [vmem:[#allocation7 + $0x30] sm:$0xff]
    %v139 = vld [vmem:[#allocation7 + $0x38] sm:$0xff]
    %v140 = vld [vmem:[#allocation7 + $0x40] sm:$0xff]
    %v141 = vld [vmem:[#allocation7 + $0x48] sm:$0xff]
    %v142 = vld [vmem:[#allocation7 + $0x50] sm:$0xff]
    %v143 = vld [vmem:[#allocation7 + $0x58] sm:$0xff]
    %v144 = vld [vmem:[#allocation7 + $0x60] sm:$0xff]
    %v145 = vld [vmem:[#allocation7 + $0x68] sm:$0xff]
    %v146 = vld [vmem:[#allocation7 + $0x70] sm:$0xff]
    %v147 = vld [vmem:[#allocation7 + $0x78] sm:$0xff]
    %v148 = vld [vmem:[#allocation7 + $0x80] sm:$0xff]
    %v149 = vld [vmem:[#allocation7 + $0x88] sm:$0xff]
    %v150 = vld [vmem:[#allocation7 + $0x90] sm:$0xff]
    %v151 = vld [vmem:[#allocation7 + $0x98] sm:$0xff]
    %v152 = vld [vmem:[#allocation7 + $0xa0] sm:$0xff]
    %v153 = vld [vmem:[#allocation7 + $0xa8] sm:$0xff]
    %v154 = vld [vmem:[#allocation7 + $0xb0] sm:$0xff]
    %v155 = vld [vmem:[#allocation7 + $0xb8] sm:$0xff]
    %v156 = vld [vmem:[#allocation7 + $0xc0] sm:$0xff]
    %v157 = vld [vmem:[#allocation7 + $0xc8] sm:$0xff]
    %v158 = vld [vmem:[#allocation7 + $0xd0] sm:$0xff]
    %v159 = vld [vmem:[#allocation7 + $0xd8] sm:$0xff]
    %v160 = vld [vmem:[#allocation7 + $0xe0] sm:$0xff]
    %v161 = vld [vmem:[#allocation7 + $0xe8] sm:$0xff]
    %v162 = vld [vmem:[#allocation7 + $0xf0] sm:$0xff]
    %v163 = vld [vmem:[#allocation7 + $0xf8] sm:$0xff]
    %v164 = vld [vmem:[#allocation7 + $0x100] sm:$0xff]
    %v165 = vld [vmem:[#allocation7 + $0x108] sm:$0xff]
    %v166 = vld [vmem:[#allocation7 + $0x110] sm:$0xff]
    %v167 = vld [vmem:[#allocation7 + $0x118] sm:$0xff]
    %v168 = vld [vmem:[#allocation7 + $0x120] sm:$0xff]
    %v169 = vld [vmem:[#allocation7 + $0x128] sm:$0xff]
    %v170 = vld [vmem:[#allocation7 + $0x130] sm:$0xff]
    %v171 = vld [vmem:[#allocation7 + $0x138] sm:$0xff]
    %v172 = vld [vmem:[#allocation7 + $0x140] sm:$0xff]
    %v173 = vld [vmem:[#allocation7 + $0x148] sm:$0xff]
    %v174 = vld [vmem:[#allocation7 + $0x150] sm:$0xff]
    %v175 = vld [vmem:[#allocation7 + $0x158] sm:$0xff]
    %v176 = vld [vmem:[#allocation7 + $0x160] sm:$0xff]
    %v177 = vld [vmem:[#allocation7 + $0x168] sm:$0xff]
    %v178 = vld [vmem:[#allocation7 + $0x170] sm:$0xff]
    %v179 = vld [vmem:[#allocation7 + $0x178] sm:$0xff]
    %180 = vmatpush.msra.mxu0 %v177
    %181 = vmatpush.msra.mxu0 %v174
    %182 = vmatpush.msra.mxu0 %v171
    %183 = vmatpush.msra.mxu0 %v168
    %184 = vmatpush.msra.mxu0 %v165
    %185 = vmatpush.msra.mxu0 %v162
    %186 = vmatpush.msra.mxu0 %v159
    %187 = vmatpush.msra.mxu0 %v156
    %188 = vmatpush.msra.mxu0 %v153
    %189 = vmatpush.msra.mxu0 %v150
    %190 = vmatpush.msra.mxu0 %v147
    %191 = vmatpush.msra.mxu0 %v144
    %192 = vmatpush.msra.mxu0 %v141
    %193 = vmatpush.msra.mxu0 %v138
    %194 = vmatpush.msra.mxu0 %v135
    %195 = vmatpush.msra.mxu0 %v132
    %196 = vmatmul.f32.gmra.mxu0 %v130
    %v197 = vpop.f32.mrf.mxu0
    %v198 = vadd.f32 0.0, %v197
    %199 = vmatmul.f32.gmra.mxu0 %v131
    %v200 = vpop.f32.mrf.mxu0
    %v201 = vadd.f32 0.0, %v200
    %202 = vdwg.mxu0
    %203 = vmatpush.msra.mxu0 %v178
    %204 = vmatpush.msra.mxu0 %v175
    %205 = vmatpush.msra.mxu0 %v172
    %206 = vmatpush.msra.mxu0 %v169
    %207 = vmatpush.msra.mxu0 %v166
    %208 = vmatpush.msra.mxu0 %v163
    %209 = vmatpush.msra.mxu0 %v160
    %210 = vmatpush.msra.mxu0 %v157
    %211 = vmatpush.msra.mxu0 %v154
    %212 = vmatpush.msra.mxu0 %v151
    %213 = vmatpush.msra.mxu0 %v148
    %214 = vmatpush.msra.mxu0 %v145
    %215 = vmatpush.msra.mxu0 %v142
    %216 = vmatpush.msra.mxu0 %v139
    %217 = vmatpush.msra.mxu0 %v136
    %218 = vmatpush.msra.mxu0 %v133
    %219 = vmatmul.f32.gmra.mxu0 %v130
    %v220 = vpop.f32.mrf.mxu0
    %v221 = vadd.f32 0.0, %v220
    %222 = vmatmul.f32.gmra.mxu0 %v131
    %v223 = vpop.f32.mrf.mxu0
    %v224 = vadd.f32 0.0, %v223
    %225 = vdwg.mxu0
    %226 = vmatpush.msra.mxu0 %v179
    %227 = vmatpush.msra.mxu0 %v176
    %228 = vmatpush.msra.mxu0 %v173
    %229 = vmatpush.msra.mxu0 %v170
    %230 = vmatpush.msra.mxu0 %v167
    %231 = vmatpush.msra.mxu0 %v164
    %232 = vmatpush.msra.mxu0 %v161
    %233 = vmatpush.msra.mxu0 %v158
    %234 = vmatpush.msra.mxu0 %v155
    %235 = vmatpush.msra.mxu0 %v152
    %236 = vmatpush.msra.mxu0 %v149
    %237 = vmatpush.msra.mxu0 %v146
    %238 = vmatpush.msra.mxu0 %v143
    %239 = vmatpush.msra.mxu0 %v140
    %240 = vmatpush.msra.mxu0 %v137
    %241 = vmatpush.msra.mxu0 %v134
    %242 = vmatmul.f32.gmra.mxu0 %v130
    %v243 = vpop.f32.mrf.mxu0
    %v244 = vadd.f32 0.0, %v243
    %245 = vmatmul.f32.gmra.mxu0 %v131
    %v246 = vpop.f32.mrf.mxu0
    %v247 = vadd.f32 0.0, %v246
    %248 = vdwg.mxu0
    %v249 = vld [vmem:[#allocation8] sm:$0x7]
    %v250 = vld [vmem:[#allocation10] sm:$0x7]
    %251 = vmatpush.xpose.msra.mxu0 0.0
    %252 = vmatpush.xpose.msra.mxu0 0.0
    %253 = vmatpush.xpose.msra.mxu0 0.0
    %254 = vmatpush.xpose.msra.mxu0 0.0
    %255 = vmatpush.xpose.msra.mxu0 0.0
    %256 = vmatpush.xpose.msra.mxu0 0.0
    %257 = vmatpush.xpose.msra.mxu0 0.0
    %258 = vmatpush.xpose.msra.mxu0 0.0
    %259 = vmatpush.xpose.msra.mxu0 0.0
    %260 = vmatpush.xpose.msra.mxu0 0.0
    %261 = vmatpush.xpose.msra.mxu0 0.0
    %262 = vmatpush.xpose.msra.mxu0 0.0
    %263 = vmatpush.xpose.msra.mxu0 0.0
    %264 = vmatpush.xpose.msra.mxu0 0.0
    %265 = vmatpush.xpose.msra.mxu0 %v201
    %266 = vmatpush.xpose.msra.mxu0 %v198
    %267 = vmatmul.f32.gmra.mxu0 %v249
    %v268 = vpop.f32.mrf.mxu0
    %v269 = vadd.f32 0.0, %v268
    %270 = vdwg.mxu0
    %v271 = vperm.slane %v250, 0
    %v272 = vmul.f32 %v198, %v271
    %v273 = vmul.f32 %v201, %v271
    %274 = vadd.xlane.f32.xlu0 %v272
    %v275 = vpop.xlane.xlu0 %274
    %276 = vadd.xlane.f32.xlu0 %v273
    %v277 = vpop.xlane.xlu0 %276
    %v278 = vperm.slane %v269, 0
    %v279 = vadd.f32 %v275, %v278
    %v280 = vadd.f32 %v277, %v278
    %vm281 = vcmp.ge.f32.partialorder %v279, 0.0
    %vm282 = vcmp.ge.f32.partialorder %v280, 0.0
    %v283 = vmul.f32 %v279, 0.2
    %v284 = vmul.f32 %v280, 0.2
    %v285 = vsel %vm281, %v279, %v283
    %v286 = vsel %vm282, %v280, %v284
    %v287 = vsel %vm128, %v285, -1e+30
    %v288 = vsel %vm129, %v286, -1e+30
    %vm289 = vcmask 130048
    %v290 = vsel %vm289, %v287, -inf
    %291 = vmax.xlane.f32.xlu0 %v290
    %v292 = vpop.xlane.xlu0 %291
    %v293 = vsel %vm289, %v288, -inf
    %294 = vmax.xlane.f32.xlu0 %v293
    %v295 = vpop.xlane.xlu0 %294
    %v296 = vsub.f32 %v287, %v292
    %v297 = vsub.f32 %v288, %v295
    %v298 = vmul.f32 %v296, 1.442695
    %v299 = vpow.pop %v298
    %v300 = vmul.f32 %v297, 1.442695
    %v301 = vpow.pop %v300
    %v302 = vsel %vm128, %v299, 0.0
    %v303 = vsel %vm129, %v301, 0.0
    %v304 = vsel %vm289, %v302, 0.0
    %305 = vadd.xlane.f32.xlu0 %v304
    %v306 = vpop.xlane.xlu0 %305
    %v307 = vsel %vm289, %v303, 0.0
    %308 = vadd.xlane.f32.xlu0 %v307
    %v309 = vpop.xlane.xlu0 %308
    %v310 = vrcp.pop %v306
    %v311 = vmul.f32 %v306, %v310
    %v312 = vsub.f32 1.0, %v311
    %v313 = vmul.f32 %v310, %v312
    %v314 = vadd.f32 %v310, %v313
    %vm315 = vweird.f32 %v306
    %vm316 = vweird.f32 %v310
    %vm317 = vmor %vm315, %vm316
    %v318 = vsel %vm317, %v310, %v314
    %v319 = vand.u32 2147483647, %v306
    %vm320 = vcmp.eq.f32.partialorder %v319, 8.507059e+37
    %v321 = vand.u32 %v306, 2147483648
    %v322 = vor.u32 1.1754944e-38, %v321
    %v323 = vsel %vm320, %v322, %v318
    %v324 = vrcp.pop %v309
    %v325 = vmul.f32 %v309, %v324
    %v326 = vsub.f32 1.0, %v325
    %v327 = vmul.f32 %v324, %v326
    %v328 = vadd.f32 %v324, %v327
    %vm329 = vweird.f32 %v309
    %vm330 = vweird.f32 %v324
    %vm331 = vmor %vm329, %vm330
    %v332 = vsel %vm331, %v324, %v328
    %v333 = vand.u32 2147483647, %v309
    %vm334 = vcmp.eq.f32.partialorder %v333, 8.507059e+37
    %v335 = vand.u32 %v309, 2147483648
    %v336 = vor.u32 1.1754944e-38, %v335
    %v337 = vsel %vm334, %v336, %v332
    %v338 = vmul.f32 %v302, %v323
    %v339 = vmul.f32 %v303, %v337
    %v341 = vrot.slane %v249, 1
    %343 = vmatpush.xpose.msra.mxu0 0.0
    %344 = vmatpush.xpose.msra.mxu0 0.0
    %345 = vmatpush.xpose.msra.mxu0 0.0
    %346 = vmatpush.xpose.msra.mxu0 0.0
    %347 = vmatpush.xpose.msra.mxu0 0.0
    %348 = vmatpush.xpose.msra.mxu0 0.0
    %349 = vmatpush.xpose.msra.mxu0 0.0
    %350 = vmatpush.xpose.msra.mxu0 0.0
    %351 = vmatpush.xpose.msra.mxu0 0.0
    %352 = vmatpush.xpose.msra.mxu0 0.0
    %353 = vmatpush.xpose.msra.mxu0 0.0
    %354 = vmatpush.xpose.msra.mxu0 0.0
    %355 = vmatpush.xpose.msra.mxu0 0.0
    %356 = vmatpush.xpose.msra.mxu0 0.0
    %357 = vmatpush.xpose.msra.mxu0 %v224
    %358 = vmatpush.xpose.msra.mxu0 %v221
    %359 = vmatmul.f32.gmra.mxu0 %v341
    %v360 = vpop.f32.mrf.mxu0
    %v361 = vadd.f32 0.0, %v360
    %362 = vdwg.mxu0
    %v363 = vperm.slane %v250, 1
    %v364 = vmul.f32 %v221, %v363
    %v365 = vmul.f32 %v224, %v363
    %366 = vadd.xlane.f32.xlu0 %v364
    %v367 = vpop.xlane.xlu0 %366
    %368 = vadd.xlane.f32.xlu0 %v365
    %v369 = vpop.xlane.xlu0 %368
    %v370 = vperm.slane %v361, 0
    %v371 = vadd.f32 %v367, %v370
    %v372 = vadd.f32 %v369, %v370
    %vm373 = vcmp.ge.f32.partialorder %v371, 0.0
    %vm374 = vcmp.ge.f32.partialorder %v372, 0.0
    %v375 = vmul.f32 %v371, 0.2
    %v376 = vmul.f32 %v372, 0.2
    %v377 = vsel %vm373, %v371, %v375
    %v378 = vsel %vm374, %v372, %v376
    %v379 = vsel %vm128, %v377, -1e+30
    %v380 = vsel %vm129, %v378, -1e+30
    %v381 = vsel %vm289, %v379, -inf
    %382 = vmax.xlane.f32.xlu0 %v381
    %v383 = vpop.xlane.xlu0 %382
    %v384 = vsel %vm289, %v380, -inf
    %385 = vmax.xlane.f32.xlu0 %v384
    %v386 = vpop.xlane.xlu0 %385
    %v387 = vsub.f32 %v379, %v383
    %v388 = vsub.f32 %v380, %v386
    %v389 = vmul.f32 %v387, 1.442695
    %v390 = vpow.pop %v389
    %v391 = vmul.f32 %v388, 1.442695
    %v392 = vpow.pop %v391
    %v393 = vsel %vm128, %v390, 0.0
    %v394 = vsel %vm129, %v392, 0.0
    %v395 = vsel %vm289, %v393, 0.0
    %396 = vadd.xlane.f32.xlu0 %v395
    %v397 = vpop.xlane.xlu0 %396
    %v398 = vsel %vm289, %v394, 0.0
    %399 = vadd.xlane.f32.xlu0 %v398
    %v400 = vpop.xlane.xlu0 %399
    %v401 = vrcp.pop %v397
    %v402 = vmul.f32 %v397, %v401
    %v403 = vsub.f32 1.0, %v402
    %v404 = vmul.f32 %v401, %v403
    %v405 = vadd.f32 %v401, %v404
    %vm406 = vweird.f32 %v397
    %vm407 = vweird.f32 %v401
    %vm408 = vmor %vm406, %vm407
    %v409 = vsel %vm408, %v401, %v405
    %v410 = vand.u32 2147483647, %v397
    %vm411 = vcmp.eq.f32.partialorder %v410, 8.507059e+37
    %v412 = vand.u32 %v397, 2147483648
    %v413 = vor.u32 1.1754944e-38, %v412
    %v414 = vsel %vm411, %v413, %v409
    %v415 = vrcp.pop %v400
    %v416 = vmul.f32 %v400, %v415
    %v417 = vsub.f32 1.0, %v416
    %v418 = vmul.f32 %v415, %v417
    %v419 = vadd.f32 %v415, %v418
    %vm420 = vweird.f32 %v400
    %vm421 = vweird.f32 %v415
    %vm422 = vmor %vm420, %vm421
    %v423 = vsel %vm422, %v415, %v419
    %v424 = vand.u32 2147483647, %v400
    %vm425 = vcmp.eq.f32.partialorder %v424, 8.507059e+37
    %v426 = vand.u32 %v400, 2147483648
    %v427 = vor.u32 1.1754944e-38, %v426
    %v428 = vsel %vm425, %v427, %v423
    %v429 = vmul.f32 %v393, %v414
    %v430 = vmul.f32 %v394, %v428
    %v432 = vsel %vm289, %v429, 0
    %v435 = vsel %vm289, %v430, 0
    %437 = vmatpush.msra.mxu0 0.0
    %438 = vmatpush.msra.mxu0 0.0
    %439 = vmatpush.msra.mxu0 0.0
    %440 = vmatpush.msra.mxu0 0.0
    %441 = vmatpush.msra.mxu0 0.0
    %442 = vmatpush.msra.mxu0 0.0
    %443 = vmatpush.msra.mxu0 0.0
    %444 = vmatpush.msra.mxu0 0.0
    %445 = vmatpush.msra.mxu0 0.0
    %446 = vmatpush.msra.mxu0 0.0
    %447 = vmatpush.msra.mxu0 0.0
    %448 = vmatpush.msra.mxu0 0.0
    %449 = vmatpush.msra.mxu0 0.0
    %450 = vmatpush.msra.mxu0 0.0
    %451 = vmatpush.msra.mxu0 %v224
    %452 = vmatpush.msra.mxu0 %v221
    %453 = vmatmul.f32.gmra.mxu0 %v432
    %v454 = vpop.f32.mrf.mxu0
    %v455 = vadd.f32 0.0, %v454
    %456 = vmatmul.f32.gmra.mxu0 %v435
    %v457 = vpop.f32.mrf.mxu0
    %v458 = vadd.f32 0.0, %v457
    %459 = vdwg.mxu0
    %v460 = vrot.slane %v249, 2
    %462 = vmatpush.xpose.msra.mxu0 0.0
    %463 = vmatpush.xpose.msra.mxu0 0.0
    %464 = vmatpush.xpose.msra.mxu0 0.0
    %465 = vmatpush.xpose.msra.mxu0 0.0
    %466 = vmatpush.xpose.msra.mxu0 0.0
    %467 = vmatpush.xpose.msra.mxu0 0.0
    %468 = vmatpush.xpose.msra.mxu0 0.0
    %469 = vmatpush.xpose.msra.mxu0 0.0
    %470 = vmatpush.xpose.msra.mxu0 0.0
    %471 = vmatpush.xpose.msra.mxu0 0.0
    %472 = vmatpush.xpose.msra.mxu0 0.0
    %473 = vmatpush.xpose.msra.mxu0 0.0
    %474 = vmatpush.xpose.msra.mxu0 0.0
    %475 = vmatpush.xpose.msra.mxu0 0.0
    %476 = vmatpush.xpose.msra.mxu0 %v247
    %477 = vmatpush.xpose.msra.mxu0 %v244
    %478 = vmatmul.f32.gmra.mxu0 %v460
    %v479 = vpop.f32.mrf.mxu0
    %v480 = vadd.f32 0.0, %v479
    %481 = vdwg.mxu0
    %v482 = vperm.slane %v250, 2
    %v483 = vmul.f32 %v244, %v482
    %v484 = vmul.f32 %v247, %v482
    %485 = vadd.xlane.f32.xlu0 %v483
    %v486 = vpop.xlane.xlu0 %485
    %487 = vadd.xlane.f32.xlu0 %v484
    %v488 = vpop.xlane.xlu0 %487
    %v489 = vperm.slane %v480, 0
    %v490 = vadd.f32 %v486, %v489
    %v491 = vadd.f32 %v488, %v489
    %vm492 = vcmp.ge.f32.partialorder %v490, 0.0
    %vm493 = vcmp.ge.f32.partialorder %v491, 0.0
    %v494 = vmul.f32 %v490, 0.2
    %v495 = vmul.f32 %v491, 0.2
    %v496 = vsel %vm492, %v490, %v494
    %v497 = vsel %vm493, %v491, %v495
    %v498 = vsel %vm128, %v496, -1e+30
    %v499 = vsel %vm129, %v497, -1e+30
    %v500 = vsel %vm289, %v498, -inf
    %501 = vmax.xlane.f32.xlu0 %v500
    %v502 = vpop.xlane.xlu0 %501
    %v503 = vsel %vm289, %v499, -inf
    %504 = vmax.xlane.f32.xlu0 %v503
    %v505 = vpop.xlane.xlu0 %504
    %v506 = vsub.f32 %v498, %v502
    %v507 = vsub.f32 %v499, %v505
    %v508 = vmul.f32 %v506, 1.442695
    %v509 = vpow.pop %v508
    %v510 = vmul.f32 %v507, 1.442695
    %v511 = vpow.pop %v510
    %v512 = vsel %vm128, %v509, 0.0
    %v513 = vsel %vm129, %v511, 0.0
    %v514 = vsel %vm289, %v512, 0.0
    %515 = vadd.xlane.f32.xlu0 %v514
    %v516 = vpop.xlane.xlu0 %515
    %v517 = vsel %vm289, %v513, 0.0
    %518 = vadd.xlane.f32.xlu0 %v517
    %v519 = vpop.xlane.xlu0 %518
    %v520 = vrcp.pop %v516
    %v521 = vmul.f32 %v516, %v520
    %v522 = vsub.f32 1.0, %v521
    %v523 = vmul.f32 %v520, %v522
    %v524 = vadd.f32 %v520, %v523
    %vm525 = vweird.f32 %v516
    %vm526 = vweird.f32 %v520
    %vm527 = vmor %vm525, %vm526
    %v528 = vsel %vm527, %v520, %v524
    %v529 = vand.u32 2147483647, %v516
    %vm530 = vcmp.eq.f32.partialorder %v529, 8.507059e+37
    %v531 = vand.u32 %v516, 2147483648
    %v532 = vor.u32 1.1754944e-38, %v531
    %v533 = vsel %vm530, %v532, %v528
    %v534 = vrcp.pop %v519
    %v535 = vmul.f32 %v519, %v534
    %v536 = vsub.f32 1.0, %v535
    %v537 = vmul.f32 %v534, %v536
    %v538 = vadd.f32 %v534, %v537
    %vm539 = vweird.f32 %v519
    %vm540 = vweird.f32 %v534
    %vm541 = vmor %vm539, %vm540
    %v542 = vsel %vm541, %v534, %v538
    %v543 = vand.u32 2147483647, %v519
    %vm544 = vcmp.eq.f32.partialorder %v543, 8.507059e+37
    %v545 = vand.u32 %v519, 2147483648
    %v546 = vor.u32 1.1754944e-38, %v545
    %v547 = vsel %vm544, %v546, %v542
    %v548 = vmul.f32 %v512, %v533
    %v549 = vmul.f32 %v513, %v547
    %v551 = vsel %vm289, %v548, 0
    %v554 = vsel %vm289, %v549, 0
    %556 = vmatpush.msra.mxu0 0.0
    %557 = vmatpush.msra.mxu0 0.0
    %558 = vmatpush.msra.mxu0 0.0
    %559 = vmatpush.msra.mxu0 0.0
    %560 = vmatpush.msra.mxu0 0.0
    %561 = vmatpush.msra.mxu0 0.0
    %562 = vmatpush.msra.mxu0 0.0
    %563 = vmatpush.msra.mxu0 0.0
    %564 = vmatpush.msra.mxu0 0.0
    %565 = vmatpush.msra.mxu0 0.0
    %566 = vmatpush.msra.mxu0 0.0
    %567 = vmatpush.msra.mxu0 0.0
    %568 = vmatpush.msra.mxu0 0.0
    %569 = vmatpush.msra.mxu0 0.0
    %570 = vmatpush.msra.mxu0 %v247
    %571 = vmatpush.msra.mxu0 %v244
    %572 = vmatmul.f32.gmra.mxu0 %v551
    %v573 = vpop.f32.mrf.mxu0
    %v574 = vadd.f32 0.0, %v573
    %575 = vmatmul.f32.gmra.mxu0 %v554
    %v576 = vpop.f32.mrf.mxu0
    %v577 = vadd.f32 0.0, %v576
    %578 = vdwg.mxu0
    %v580 = vsel %vm289, %v338, 0
    %v583 = vsel %vm289, %v339, 0
    %585 = vmatpush.msra.mxu0 0.0
    %586 = vmatpush.msra.mxu0 0.0
    %587 = vmatpush.msra.mxu0 0.0
    %588 = vmatpush.msra.mxu0 0.0
    %589 = vmatpush.msra.mxu0 0.0
    %590 = vmatpush.msra.mxu0 0.0
    %591 = vmatpush.msra.mxu0 0.0
    %592 = vmatpush.msra.mxu0 0.0
    %593 = vmatpush.msra.mxu0 0.0
    %594 = vmatpush.msra.mxu0 0.0
    %595 = vmatpush.msra.mxu0 0.0
    %596 = vmatpush.msra.mxu0 0.0
    %597 = vmatpush.msra.mxu0 0.0
    %598 = vmatpush.msra.mxu0 0.0
    %599 = vmatpush.msra.mxu0 %v201
    %600 = vmatpush.msra.mxu0 %v198
    %601 = vmatmul.f32.gmra.mxu0 %v580
    %v602 = vpop.f32.mrf.mxu0
    %v603 = vadd.f32 %v455, %v602
    %604 = vmatmul.f32.gmra.mxu0 %v583
    %v605 = vpop.f32.mrf.mxu0
    %v606 = vadd.f32 %v458, %v605
    %607 = vdwg.mxu0
    %v608 = vadd.f32 %v603, %v574
    %v609 = vadd.f32 %v606, %v577
    %v610 = vmul.f32 %v608, 0.33333334
    %v611 = vmul.f32 %v609, 0.33333334
    %v612 = vld [vmem:[%s5] sm:$0x1]
    %v614 = vperm.slane %v612, 0
    %v616 = vadd.f32 %v610, %v614
    %v617 = vadd.f32 %v611, %v614
    %v618 = vmul.f32 %v616, 0.5
    %v619 = vmul.f32 %v617, 0.5
    %v620 = vmul.f32 %v616, 0.70710677
    %v621 = vmul.f32 %v617, 0.70710677
    %v622 = vmul.f32 %v620, %v620
    %v623 = vmin.f32 16.0, %v622
    %v624 = vmul.f32 %v623, 2.1237322e-06
    %v625 = vadd.f32 %v624, 0.00028619796
    %v626 = vmul.f32 %v623, %v625
    %v627 = vadd.f32 %v626, 0.0036580483
    %v628 = vmul.f32 %v623, %v627
    %v629 = vadd.f32 %v628, 0.05243302
    %v630 = vmul.f32 %v623, %v629
    %v631 = vadd.f32 %v630, 0.18741608
    %v632 = vmul.f32 %v623, %v631
    %v633 = vadd.f32 %v632, 1.1283791
    %v634 = vmul.f32 %v620, %v633
    %v635 = vmul.f32 %v623, 3.8918573e-05
    %v636 = vadd.f32 %v635, 0.001143296
    %v637 = vmul.f32 %v623, %v636
    %v638 = vadd.f32 %v637, 0.014752088
    %v639 = vmul.f32 %v623, %v638
    %v640 = vadd.f32 %v639, 0.112945676
    %v641 = vmul.f32 %v623, %v640
    %v642 = vadd.f32 %v641, 0.4994258
    %v643 = vmul.f32 %v623, %v642
    %v644 = vadd.f32 %v643, 1.0
    %v645 = vrcp.pop %v644
    %v646 = vmul.f32 %v644, %v645
    %v647 = vsub.f32 1.0, %v646
    %v648 = vmul.f32 %v645, %v647
    %v649 = vadd.f32 %v645, %v648
    %vm650 = vweird.f32 %v644
    %vm651 = vweird.f32 %v645
    %vm652 = vmor %vm650, %vm651
    %v653 = vsel %vm652, %v645, %v649
    %v654 = vand.u32 2147483647, %v644
    %vm655 = vcmp.eq.f32.partialorder %v654, 8.507059e+37
    %v656 = vand.u32 %v644, 2147483648
    %v657 = vor.u32 1.1754944e-38, %v656
    %v658 = vsel %vm655, %v657, %v653
    %v659 = vmul.f32 %v634, %v658
    %v660 = vmin.f32 %v659, 1.0
    %v661 = vmax.f32 %v660, -1.0
    %v662 = vmul.f32 %v621, %v621
    %v663 = vmin.f32 16.0, %v662
    %v664 = vmul.f32 %v663, 2.1237322e-06
    %v665 = vadd.f32 %v664, 0.00028619796
    %v666 = vmul.f32 %v663, %v665
    %v667 = vadd.f32 %v666, 0.0036580483
    %v668 = vmul.f32 %v663, %v667
    %v669 = vadd.f32 %v668, 0.05243302
    %v670 = vmul.f32 %v663, %v669
    %v671 = vadd.f32 %v670, 0.18741608
    %v672 = vmul.f32 %v663, %v671
    %v673 = vadd.f32 %v672, 1.1283791
    %v674 = vmul.f32 %v621, %v673
    %v675 = vmul.f32 %v663, 3.8918573e-05
    %v676 = vadd.f32 %v675, 0.001143296
    %v677 = vmul.f32 %v663, %v676
    %v678 = vadd.f32 %v677, 0.014752088
    %v679 = vmul.f32 %v663, %v678
    %v680 = vadd.f32 %v679, 0.112945676
    %v681 = vmul.f32 %v663, %v680
    %v682 = vadd.f32 %v681, 0.4994258
    %v683 = vmul.f32 %v663, %v682
    %v684 = vadd.f32 %v683, 1.0
    %v685 = vrcp.pop %v684
    %v686 = vmul.f32 %v684, %v685
    %v687 = vsub.f32 1.0, %v686
    %v688 = vmul.f32 %v685, %v687
    %v689 = vadd.f32 %v685, %v688
    %vm690 = vweird.f32 %v684
    %vm691 = vweird.f32 %v685
    %vm692 = vmor %vm690, %vm691
    %v693 = vsel %vm692, %v685, %v689
    %v694 = vand.u32 2147483647, %v684
    %vm695 = vcmp.eq.f32.partialorder %v694, 8.507059e+37
    %v696 = vand.u32 %v684, 2147483648
    %v697 = vor.u32 1.1754944e-38, %v696
    %v698 = vsel %vm695, %v697, %v693
    %v699 = vmul.f32 %v674, %v698
    %v700 = vmin.f32 %v699, 1.0
    %v701 = vmax.f32 %v700, -1.0
    %v702 = vadd.f32 %v661, 1.0
    %v703 = vadd.f32 %v701, 1.0
    %v704 = vmul.f32 %v618, %v702
    %v705 = vmul.f32 %v619, %v703
    %v706 = vld [vmem:[#allocation11] sm:$0xff]
    %v707 = vld [vmem:[#allocation11 + $0x8] sm:$0xff]
    %v708 = vld [vmem:[#allocation11 + $0x10] sm:$0xff]
    %v709 = vld [vmem:[#allocation11 + $0x18] sm:$0xff]
    %v710 = vld [vmem:[#allocation11 + $0x20] sm:$0xff]
    %v711 = vld [vmem:[#allocation11 + $0x28] sm:$0xff]
    %v712 = vld [vmem:[#allocation11 + $0x30] sm:$0xff]
    %v713 = vld [vmem:[#allocation11 + $0x38] sm:$0xff]
    %v714 = vld [vmem:[#allocation11 + $0x40] sm:$0xff]
    %v715 = vld [vmem:[#allocation11 + $0x48] sm:$0xff]
    %v716 = vld [vmem:[#allocation11 + $0x50] sm:$0xff]
    %v717 = vld [vmem:[#allocation11 + $0x58] sm:$0xff]
    %v718 = vld [vmem:[#allocation11 + $0x60] sm:$0xff]
    %v719 = vld [vmem:[#allocation11 + $0x68] sm:$0xff]
    %v720 = vld [vmem:[#allocation11 + $0x70] sm:$0xff]
    %v721 = vld [vmem:[#allocation11 + $0x78] sm:$0xff]
    %722 = vmatpush.msra.mxu0 %v721
    %723 = vmatpush.msra.mxu0 %v720
    %724 = vmatpush.msra.mxu0 %v719
    %725 = vmatpush.msra.mxu0 %v718
    %726 = vmatpush.msra.mxu0 %v717
    %727 = vmatpush.msra.mxu0 %v716
    %728 = vmatpush.msra.mxu0 %v715
    %729 = vmatpush.msra.mxu0 %v714
    %730 = vmatpush.msra.mxu0 %v713
    %731 = vmatpush.msra.mxu0 %v712
    %732 = vmatpush.msra.mxu0 %v711
    %733 = vmatpush.msra.mxu0 %v710
    %734 = vmatpush.msra.mxu0 %v709
    %735 = vmatpush.msra.mxu0 %v708
    %736 = vmatpush.msra.mxu0 %v707
    %737 = vmatpush.msra.mxu0 %v706
    %738 = vmatmul.f32.gmra.mxu0 %v704
    %v739 = vpop.f32.mrf.mxu0
    %v740 = vadd.f32 0.0, %v739
    %741 = vmatmul.f32.gmra.mxu0 %v705
    %v742 = vpop.f32.mrf.mxu0
    %v743 = vadd.f32 0.0, %v742
    %744 = vdwg.mxu0
    %v745 = vld [vmem:[%s7] sm:$0x1]
    %v746 = vld [vmem:[%s8] sm:$0x1]
    %747 = vmatpush.xpose.msra.mxu0 0.0
    %748 = vmatpush.xpose.msra.mxu0 0.0
    %749 = vmatpush.xpose.msra.mxu0 0.0
    %750 = vmatpush.xpose.msra.mxu0 0.0
    %751 = vmatpush.xpose.msra.mxu0 0.0
    %752 = vmatpush.xpose.msra.mxu0 0.0
    %753 = vmatpush.xpose.msra.mxu0 0.0
    %754 = vmatpush.xpose.msra.mxu0 0.0
    %755 = vmatpush.xpose.msra.mxu0 0.0
    %756 = vmatpush.xpose.msra.mxu0 0.0
    %757 = vmatpush.xpose.msra.mxu0 0.0
    %758 = vmatpush.xpose.msra.mxu0 0.0
    %759 = vmatpush.xpose.msra.mxu0 0.0
    %760 = vmatpush.xpose.msra.mxu0 0.0
    %761 = vmatpush.xpose.msra.mxu0 %v743
    %762 = vmatpush.xpose.msra.mxu0 %v740
    %763 = vmatmul.f32.gmra.mxu0 %v745
    %v764 = vpop.f32.mrf.mxu0
    %v765 = vadd.f32 0.0, %v764
    %766 = vdwg.mxu0
    %v768 = vperm.slane %v746, 0
    %v770 = vmul.f32 %v740, %v768
    %v771 = vmul.f32 %v743, %v768
    %772 = vadd.xlane.f32.xlu0 %v770
    %v773 = vpop.xlane.xlu0 %772
    %774 = vadd.xlane.f32.xlu0 %v771
    %v775 = vpop.xlane.xlu0 %774
    %v776 = vperm.slane %v765, 0
    %v777 = vadd.f32 %v773, %v776
    %v778 = vadd.f32 %v775, %v776
    %vm779 = vcmp.ge.f32.partialorder %v777, 0.0
    %vm780 = vcmp.ge.f32.partialorder %v778, 0.0
    %v781 = vmul.f32 %v777, 0.2
    %v782 = vmul.f32 %v778, 0.2
    %v783 = vsel %vm779, %v777, %v781
    %v784 = vsel %vm780, %v778, %v782
    %v785 = vsel %vm128, %v783, -1e+30
    %v786 = vsel %vm129, %v784, -1e+30
    %v787 = vsel %vm289, %v785, -inf
    %788 = vmax.xlane.f32.xlu0 %v787
    %v789 = vpop.xlane.xlu0 %788
    %v790 = vsel %vm289, %v786, -inf
    %791 = vmax.xlane.f32.xlu0 %v790
    %v792 = vpop.xlane.xlu0 %791
    %v793 = vsub.f32 %v785, %v789
    %v794 = vsub.f32 %v786, %v792
    %v795 = vmul.f32 %v793, 1.442695
    %v796 = vpow.pop %v795
    %v797 = vmul.f32 %v794, 1.442695
    %v798 = vpow.pop %v797
    %v799 = vsel %vm128, %v796, 0.0
    %v800 = vsel %vm129, %v798, 0.0
    %v801 = vsel %vm289, %v799, 0.0
    %802 = vadd.xlane.f32.xlu0 %v801
    %v803 = vpop.xlane.xlu0 %802
    %v804 = vsel %vm289, %v800, 0.0
    %805 = vadd.xlane.f32.xlu0 %v804
    %v806 = vpop.xlane.xlu0 %805
    %v807 = vrcp.pop %v803
    %v808 = vmul.f32 %v803, %v807
    %v809 = vsub.f32 1.0, %v808
    %v810 = vmul.f32 %v807, %v809
    %v811 = vadd.f32 %v807, %v810
    %vm812 = vweird.f32 %v803
    %vm813 = vweird.f32 %v807
    %vm814 = vmor %vm812, %vm813
    %v815 = vsel %vm814, %v807, %v811
    %v816 = vand.u32 2147483647, %v803
    %vm817 = vcmp.eq.f32.partialorder %v816, 8.507059e+37
    %v818 = vand.u32 %v803, 2147483648
    %v819 = vor.u32 1.1754944e-38, %v818
    %v820 = vsel %vm817, %v819, %v815
    %v821 = vrcp.pop %v806
    %v822 = vmul.f32 %v806, %v821
    %v823 = vsub.f32 1.0, %v822
    %v824 = vmul.f32 %v821, %v823
    %v825 = vadd.f32 %v821, %v824
    %vm826 = vweird.f32 %v806
    %vm827 = vweird.f32 %v821
    %vm828 = vmor %vm826, %vm827
    %v829 = vsel %vm828, %v821, %v825
    %v830 = vand.u32 2147483647, %v806
    %vm831 = vcmp.eq.f32.partialorder %v830, 8.507059e+37
    %v832 = vand.u32 %v806, 2147483648
    %v833 = vor.u32 1.1754944e-38, %v832
    %v834 = vsel %vm831, %v833, %v829
    %v835 = vmul.f32 %v799, %v820
    %v836 = vmul.f32 %v800, %v834
    %v837 = vld [vmem:[%s9] sm:$0x1]
    %v839 = vperm.slane %v837, 0
    %v842 = vsel %vm289, %v835, 0
    %v845 = vsel %vm289, %v836, 0
    %847 = vmatpush.msra.mxu0 0.0
    %848 = vmatpush.msra.mxu0 0.0
    %849 = vmatpush.msra.mxu0 0.0
    %850 = vmatpush.msra.mxu0 0.0
    %851 = vmatpush.msra.mxu0 0.0
    %852 = vmatpush.msra.mxu0 0.0
    %853 = vmatpush.msra.mxu0 0.0
    %854 = vmatpush.msra.mxu0 0.0
    %855 = vmatpush.msra.mxu0 0.0
    %856 = vmatpush.msra.mxu0 0.0
    %857 = vmatpush.msra.mxu0 0.0
    %858 = vmatpush.msra.mxu0 0.0
    %859 = vmatpush.msra.mxu0 0.0
    %860 = vmatpush.msra.mxu0 0.0
    %861 = vmatpush.msra.mxu0 %v743
    %862 = vmatpush.msra.mxu0 %v740
    %863 = vmatmul.f32.gmra.mxu0 %v842
    %v864 = vpop.f32.mrf.mxu0
    %v865 = vadd.f32 %v839, %v864
    %866 = vmatmul.f32.gmra.mxu0 %v845
    %v867 = vpop.f32.mrf.mxu0
    %v868 = vadd.f32 %v839, %v867
    %869 = vdwg.mxu0
    %870 = vst [vmem:[#allocation13] sm:$0xff] %v865
    %871 = vst [vmem:[#allocation13 + $0x8] sm:$0xff] %v868
    // Predicated region
    $region66: #{tpu_custom_call.1} parent=1 // pred_check
      _
    $region67: #{tpu_custom_call.1} parent=1 // pred_check_branch
      %873 = sbr.rel (0) target = $region69
    $region68: #{tpu_custom_call.1} parent=1 // pred_region
      %875 = vsyncadd [#allocation4], 0
      %s876 = sshll.u32 [#allocation13], 4
      %s877 = int_to_ptr.vmem [resolvable:$true] %s876
      %s878 = sshll.u32 %s10, 4
      %s879 = int_to_ptr.hbm [resolvable:$true] %s878
      %884 = dma.vmem_to_hbm [thread:$0]  %s877, 256, %s879, [#allocation4], 128, 128, 8
    $region69: #{tpu_custom_call.1} parent=1 // pred_fallthru
      _
    // Predicated region
    $region70: #{tpu_custom_call.1} parent=1 // pred_check
      _
    $region71: #{tpu_custom_call.1} parent=1 // pred_check_branch
      %886 = sbr.rel (0) target = $region73
    $region72: #{tpu_custom_call.1} parent=1 // pred_region
      %888 = dma.done [#allocation4], 256
    $region73: #{tpu_custom_call.1} parent=1 // pred_fallthru
      _
    %889 = vsyncpa [#allocation3], 1
    %890 = vsyncpa [#allocation6], 1
    %891 = vsyncpa [#allocation9], 1
    %892 = vsyncpa [#allocation12], 1
    %893 = vsyncpa [#allocation4], 1

</llo_original>
